<compile_context>
chip_gen: v6e
topology: v6e:2x2x1
jax: 0.10.0
libtpu: 0.0.40
codegen_flags: <defaults>
</compile_context>

<pallas_src>
import math

import jax
import jax.numpy as jnp
from jax.experimental import pallas as pl
from jax.experimental.pallas import tpu as pltpu


# -----------------------------------------------------------------------------
# Kernel
# -----------------------------------------------------------------------------
def critic_kernel(s_ref, a_ref,
                  w1s_ref, w1a_ref, b1_ref,
                  w2_ref, b2_ref,
                  w3_ref, b3_ref,
                  q_ref):
    """Fused forward for one batch tile: split-W1 -> ReLU -> W2 -> ReLU -> head."""
    mxu_dt = w1s_ref.dtype  # bf16 or f32 MXU operands; accumulation is f32.

    # Layer 1 (concat eliminated: two dots into one f32 accumulator).
    h = jnp.dot(s_ref[...].astype(mxu_dt), w1s_ref[...],
                preferred_element_type=jnp.float32)
    h = h + jnp.dot(a_ref[...].astype(mxu_dt), w1a_ref[...],
                    preferred_element_type=jnp.float32)
    h = jnp.maximum(h + b1_ref[...], 0.0)

    # Layer 2.
    h = jnp.dot(h.astype(mxu_dt), w2_ref[...],
                preferred_element_type=jnp.float32)
    h = jnp.maximum(h + b2_ref[...], 0.0)

    # Output head (N=1): VPU multiply + XLU lane reduction; b3 is an SMEM scalar.
    q = jnp.sum(h * w3_ref[...], axis=-1, keepdims=True) + b3_ref[0, 0]
    q_ref[...] = q.astype(q_ref.dtype)


# -----------------------------------------------------------------------------
# Param preparation (run ONCE per parameter set, reuse across forward calls)
# -----------------------------------------------------------------------------
def _round_up(x, m):
    return ((x + m - 1) // m) * m


def prepare_critic_params(params, s_dim, *, mxu_dtype=jnp.bfloat16, lane=128):
    """Split W1 by (state, action), zero-pad hidden dims to full lanes, cast.

    Returns a tuple of arrays to be passed to `critic_apply`. Call this once
    (e.g. per optimizer step / per parameter update), not per forward call.
    """
    w1, b1, w2, b2, w3, b3 = params
    h1, h2 = w1.shape[1], w2.shape[1]
    h1p, h2p = _round_up(h1, lane), _round_up(h2, lane)

    w1_s = jnp.pad(w1[:s_dim, :], ((0, 0), (0, h1p - h1))).astype(mxu_dtype)
    w1_a = jnp.pad(w1[s_dim:, :], ((0, 0), (0, h1p - h1))).astype(mxu_dtype)
    b1p = jnp.pad(b1.reshape(1, h1), ((0, 0), (0, h1p - h1))).astype(jnp.float32)
    w2p = jnp.pad(w2, ((0, h1p - h1), (0, h2p - h2))).astype(mxu_dtype)
    b2p = jnp.pad(b2.reshape(1, h2), ((0, 0), (0, h2p - h2))).astype(jnp.float32)
    w3r = jnp.pad(w3.reshape(1, h2), ((0, 0), (0, h2p - h2))).astype(jnp.float32)
    b3p = jnp.asarray(b3).reshape(1, 1).astype(jnp.float32)
    return w1_s, w1_a, b1p, w2p, b2p, w3r, b3p


def _choose_batch_tile(B, block_b, min_grid_steps):
    """Batch tile: multiple of 8 sublanes, clamped so grid has >= min_grid_steps
    (keeps both v7x TensorCores busy via the "parallel" batch axis)."""
    b8 = _round_up(max(B, 8), 8)
    tb = _round_up(max(min(block_b, b8), 8), 8)
    if min_grid_steps > 1:
        cap = _round_up(pl.cdiv(b8, min_grid_steps), 8)
        tb = max(min(tb, cap), 8)
    bp = _round_up(b8, tb)
    return tb, bp


# -----------------------------------------------------------------------------
# Forward (uses prepared params; no per-call padding/casting of weights)
# -----------------------------------------------------------------------------
def critic_apply(s, a, prepared, *, block_b=2048, min_grid_steps=2,
                 vmem_limit_bytes=None):
    """q = Critic(s, a).  s: (B, S_DIM), a: (B, A_DIM) -> (B, 1) float32."""
    w1_s, w1_a, b1p, w2p, b2p, w3r, b3p = prepared
    B, s_dim = s.shape
    a_dim = a.shape[1]
    assert w1_s.shape[0] == s_dim and w1_a.shape[0] == a_dim, "param/input mismatch"
    h1p, h2p = w2p.shape

    TB, Bp = _choose_batch_tile(B, block_b, min_grid_steps)
    if Bp != B:
        s = jnp.pad(s, ((0, Bp - B), (0, 0)))
        a = jnp.pad(a, ((0, Bp - B), (0, 0)))

    # Weights/biases: full-array blocks with a constant index map -> fetched
    # once, VMEM-resident across all grid steps (block index never changes).
    def const_spec(shape):
        return pl.BlockSpec(shape, lambda i: (0, 0))

    grid_spec = pltpu.PrefetchScalarGridSpec(
        num_scalar_prefetch=0,
        grid=(Bp // TB,),
        in_specs=[
            # Activations: tiled over the batch axis.
            pl.BlockSpec((TB, s_dim), lambda i: (i, 0)),
            pl.BlockSpec((TB, a_dim), lambda i: (i, 0)),
            # Weights / biases (VMEM resident).
            const_spec(w1_s.shape),
            const_spec(w1_a.shape),
            const_spec(b1p.shape),
            const_spec(w2p.shape),
            const_spec(b2p.shape),
            const_spec(w3r.shape),
            # b3: single scalar -> SMEM (no lane-padded VMEM tile / DMA).
            pl.BlockSpec(memory_space=pltpu.MemorySpace.SMEM),
        ],
        out_specs=pl.BlockSpec((TB, 1), lambda i: (i, 0)),
    )

    # Advisory cost estimate so XLA overlaps this tiny custom call.
    flops = int(2 * Bp * ((s_dim + a_dim) * h1p + h1p * h2p + h2p))
    weight_bytes = sum(int(x.size) * x.dtype.itemsize
                       for x in (w1_s, w1_a, b1p, w2p, b2p, w3r, b3p))
    bytes_accessed = int(Bp * (s_dim + a_dim) * s.dtype.itemsize
                         + Bp * 4 + weight_bytes)
    cost = pl.CostEstimate(flops=flops, transcendentals=0,
                           bytes_accessed=bytes_accessed)

    cp_kwargs = dict(dimension_semantics=("parallel",))
    if vmem_limit_bytes is not None:  # only needed for very large TB on v5e
        cp_kwargs["vmem_limit_bytes"] = vmem_limit_bytes

    q = pl.pallas_call(
        critic_kernel,
        out_shape=jax.ShapeDtypeStruct((Bp, 1), jnp.float32),
        grid_spec=grid_spec,
        compiler_params=pltpu.CompilerParams(**cp_kwargs),
        cost_estimate=cost,
    )(s, a, w1_s, w1_a, b1p, w2p, b2p, w3r, b3p)

    return q if Bp == B else q[:B]


def make_critic(params, s_dim, *, mxu_dtype=jnp.bfloat16, block_b=2048,
                min_grid_steps=2, vmem_limit_bytes=None):
    """Prepare (split/pad/cast) params ONCE and return a forward closure."""
    prepared = prepare_critic_params(params, s_dim, mxu_dtype=mxu_dtype)

    def apply_fn(s, a):
        return critic_apply(s, a, prepared, block_b=block_b,
                            min_grid_steps=min_grid_steps,
                            vmem_limit_bytes=vmem_limit_bytes)

    return apply_fn


def critic_forward(s, a, params, *, block_b=2048, mxu_dtype=jnp.bfloat16):
    """Convenience one-shot wrapper (prefer make_critic to cache prepared params)."""
    prepared = prepare_critic_params(params, s.shape[1], mxu_dtype=mxu_dtype)
    return critic_apply(s, a, prepared, block_b=block_b)


# -----------------------------------------------------------------------------
# Init (mimics torch.nn.Linear default init, transposed weight layout)
# -----------------------------------------------------------------------------
def init_linear(key, fan_in, fan_out):
    kw, kb = jax.random.split(key)
    bound = 1.0 / math.sqrt(fan_in)
    w = jax.random.uniform(kw, (fan_in, fan_out), jnp.float32, -bound, bound)
    b = jax.random.uniform(kb, (1, fan_out), jnp.float32, -bound, bound)
    return w, b


def reference_forward(s, a, params):
    w1, b1, w2, b2, w3, b3 = params
    x = jnp.concatenate([s, a], axis=1)
    h = jnp.maximum(x @ w1 + b1, 0.0)
    h = jnp.maximum(h @ w2 + b2, 0.0)
    return h @ w3 + b3


# TODO(synk): SAC trains twin Q-heads; fusing q1/q2 (shared s/a blocks, two
# weight sets, (TB, 2) output) into one pallas_call would halve dispatch
# overhead and s/a HBM reads, but the spec module defines a single Critic so
# only one head is implemented here.

if __name__ == "__main__":
    # Small SAC-like shapes: state_dim=12, action_dim=4 -> input_size=16,
    # hidden_sizes=(32, 32), output dim 1.
    B, S_DIM, A_DIM = 8, 12, 4
    H1, H2 = 32, 32
    input_size = S_DIM + A_DIM

    key = jax.random.PRNGKey(0)
    ks, ka, k1, k2, k3 = jax.random.split(key, 5)

    s = jax.random.normal(ks, (B, S_DIM), jnp.float32)
    a = jax.random.normal(ka, (B, A_DIM), jnp.float32)

    w1, b1 = init_linear(k1, input_size, H1)
    w2, b2 = init_linear(k2, H1, H2)
    w3, b3 = init_linear(k3, H2, 1)
    params = (w1, b1, w2, b2, w3, b3)

    q_ref = reference_forward(s, a, params)

    # Exact-numerics path (f32 MXU operands) — matches the PyTorch module.
    critic_f32 = jax.jit(make_critic(params, S_DIM, mxu_dtype=jnp.float32))
    q32 = jax.block_until_ready(critic_f32(s, a))
    assert q32.shape == (B, 1), q32.shape
    assert jnp.allclose(q32, q_ref, atol=1e-4, rtol=1e-4), "f32 mismatch vs reference"

    # Default fast path (bf16 MXU operands, f32 accumulate) — looser tolerance.
    critic_fast = jax.jit(make_critic(params, S_DIM))  # mxu_dtype=bf16 default
    qbf = jax.block_until_ready(critic_fast(s, a))
    assert qbf.shape == (B, 1), qbf.shape
    assert jnp.allclose(qbf, q_ref, atol=5e-2, rtol=5e-2), "bf16 mismatch vs reference"

    print("KERNEL_OK")
</pallas_src>

<mosaic_0001>
module attributes {stable_mosaic.version = 11 : i64} {
  func.func @critic_kernel(%arg0: i32, %arg1: memref<8x12xf32, #tpu.memory_space<vmem>>, %arg2: memref<8x4xf32, #tpu.memory_space<vmem>>, %arg3: memref<12x128xf32, #tpu.memory_space<vmem>>, %arg4: memref<4x128xf32, #tpu.memory_space<vmem>>, %arg5: memref<1x128xf32, #tpu.memory_space<vmem>>, %arg6: memref<128x128xf32, #tpu.memory_space<vmem>>, %arg7: memref<1x128xf32, #tpu.memory_space<vmem>>, %arg8: memref<1x128xf32, #tpu.memory_space<vmem>>, %arg9: memref<1x1xf32, #tpu.memory_space<smem>>, %arg10: memref<8x1xf32, #tpu.memory_space<vmem>>) attributes {dimension_semantics = [#tpu.dimension_semantics<parallel>], iteration_bounds = array<i64: 1>, scalar_prefetch = 0 : i64, scratch_operands = 0 : i64, tpu.core_type = #tpu.core_type<tc>, window_params = [{transform_indices = @transform_0, window_bounds = array<i64: 8, 12>}, {transform_indices = @transform_1, window_bounds = array<i64: 8, 4>}, {pipeline_mode = #tpu.pipeline_mode<synchronous>, transform_indices = @transform_2, window_bounds = array<i64: 12, 128>}, {pipeline_mode = #tpu.pipeline_mode<synchronous>, transform_indices = @transform_3, window_bounds = array<i64: 4, 128>}, {pipeline_mode = #tpu.pipeline_mode<synchronous>, transform_indices = @transform_4, window_bounds = array<i64: 1, 128>}, {pipeline_mode = #tpu.pipeline_mode<synchronous>, transform_indices = @transform_5, window_bounds = array<i64: 128, 128>}, {pipeline_mode = #tpu.pipeline_mode<synchronous>, transform_indices = @transform_6, window_bounds = array<i64: 1, 128>}, {pipeline_mode = #tpu.pipeline_mode<synchronous>, transform_indices = @transform_7, window_bounds = array<i64: 1, 128>}, {transform_indices = @transform_8, window_bounds = array<i64: 1, 1>}, {transform_indices = @transform_9, window_bounds = array<i64: 8, 1>}]} {
    %c0 = arith.constant 0 : index
    %c0_0 = arith.constant 0 : index
    %0 = vector.load %arg1[%c0, %c0_0] : memref<8x12xf32, #tpu.memory_space<vmem>>, vector<8x12xf32>
    %c0_1 = arith.constant 0 : index
    %c0_2 = arith.constant 0 : index
    %1 = vector.load %arg3[%c0_1, %c0_2] : memref<12x128xf32, #tpu.memory_space<vmem>>, vector<12x128xf32>
    %cst = arith.constant dense<0.000000e+00> : vector<8x128xf32>
    %2 = tpu.matmul %0, %1, %cst {dimension_numbers = #tpu.dot_dimension_numbers<[1], [0], [0], [1], [0, 0, 1, 1], [], []>} : vector<8x12xf32>, vector<12x128xf32>, vector<8x128xf32> -> vector<8x128xf32>
    %c0_3 = arith.constant 0 : index
    %c0_4 = arith.constant 0 : index
    %3 = vector.load %arg2[%c0_3, %c0_4] : memref<8x4xf32, #tpu.memory_space<vmem>>, vector<8x4xf32>
    %c0_5 = arith.constant 0 : index
    %c0_6 = arith.constant 0 : index
    %4 = vector.load %arg4[%c0_5, %c0_6] : memref<4x128xf32, #tpu.memory_space<vmem>>, vector<4x128xf32>
    %cst_7 = arith.constant dense<0.000000e+00> : vector<8x128xf32>
    %5 = tpu.matmul %3, %4, %cst_7 {dimension_numbers = #tpu.dot_dimension_numbers<[1], [0], [0], [1], [0, 0, 1, 1], [], []>} : vector<8x4xf32>, vector<4x128xf32>, vector<8x128xf32> -> vector<8x128xf32>
    %6 = arith.addf %2, %5 : vector<8x128xf32>
    %c0_8 = arith.constant 0 : index
    %c0_9 = arith.constant 0 : index
    %7 = vector.load %arg5[%c0_8, %c0_9] : memref<1x128xf32, #tpu.memory_space<vmem>>, vector<1x128xf32>
    %8 = vector.broadcast %7 : vector<1x128xf32> to vector<8x128xf32>
    %9 = arith.addf %6, %8 : vector<8x128xf32>
    %cst_10 = arith.constant 0.000000e+00 : f32
    %10 = vector.broadcast %cst_10 : f32 to vector<8x128xf32>
    %11 = arith.maximumf %9, %10 : vector<8x128xf32>
    %c0_11 = arith.constant 0 : index
    %c0_12 = arith.constant 0 : index
    %12 = vector.load %arg6[%c0_11, %c0_12] : memref<128x128xf32, #tpu.memory_space<vmem>>, vector<128x128xf32>
    %cst_13 = arith.constant dense<0.000000e+00> : vector<8x128xf32>
    %13 = tpu.matmul %11, %12, %cst_13 {dimension_numbers = #tpu.dot_dimension_numbers<[1], [0], [0], [1], [0, 0, 1, 1], [], []>} : vector<8x128xf32>, vector<128x128xf32>, vector<8x128xf32> -> vector<8x128xf32>
    %c0_14 = arith.constant 0 : index
    %c0_15 = arith.constant 0 : index
    %14 = vector.load %arg7[%c0_14, %c0_15] : memref<1x128xf32, #tpu.memory_space<vmem>>, vector<1x128xf32>
    %15 = vector.broadcast %14 : vector<1x128xf32> to vector<8x128xf32>
    %16 = arith.addf %13, %15 : vector<8x128xf32>
    %cst_16 = arith.constant 0.000000e+00 : f32
    %17 = vector.broadcast %cst_16 : f32 to vector<8x128xf32>
    %18 = arith.maximumf %16, %17 : vector<8x128xf32>
    %c0_17 = arith.constant 0 : index
    %c0_18 = arith.constant 0 : index
    %19 = vector.load %arg8[%c0_17, %c0_18] : memref<1x128xf32, #tpu.memory_space<vmem>>, vector<1x128xf32>
    %20 = vector.broadcast %19 : vector<1x128xf32> to vector<8x128xf32>
    %21 = arith.mulf %18, %20 : vector<8x128xf32>
    %cst_19 = arith.constant dense<0.000000e+00> : vector<8xf32>
    %22 = vector.multi_reduction <add>, %21, %cst_19 [1] : vector<8x128xf32> to vector<8xf32>
    %23 = vector.shape_cast %22 : vector<8xf32> to vector<8x1xf32>
    %c0_20 = arith.constant 0 : index
    %c0_21 = arith.constant 0 : index
    %24 = memref.load %arg9[%c0_20, %c0_21] : memref<1x1xf32, #tpu.memory_space<smem>>
    %25 = vector.broadcast %24 : f32 to vector<8x1xf32>
    %26 = arith.addf %23, %25 : vector<8x1xf32>
    %c0_22 = arith.constant 0 : index
    %c0_23 = arith.constant 0 : index
    %27 = vector.load %arg10[%c0_22, %c0_23] : memref<8x1xf32, #tpu.memory_space<vmem>>, vector<8x1xf32>
    tpu.vector_store %arg10[%c0_22, %c0_23], %26 {strides = array<i32>} : memref<8x1xf32, #tpu.memory_space<vmem>>, vector<8x1xf32>,
    return
  }
  func.func @transform_0(%arg0: i32) -> (i32, i32) {
    %c0_i32 = arith.constant 0 : i32
    %c0_i32_0 = arith.constant 0 : i32
    return %arg0, %c0_i32 : i32, i32
  }
  func.func @transform_1(%arg0: i32) -> (i32, i32) {
    %c0_i32 = arith.constant 0 : i32
    %c0_i32_0 = arith.constant 0 : i32
    return %arg0, %c0_i32 : i32, i32
  }
  func.func @transform_2(%arg0: i32) -> (i32, i32) {
    %c0_i32 = arith.constant 0 : i32
    %c0_i32_0 = arith.constant 0 : i32
    %c0_i32_1 = arith.constant 0 : i32
    return %c0_i32, %c0_i32_0 : i32, i32
  }
  func.func @transform_3(%arg0: i32) -> (i32, i32) {
    %c0_i32 = arith.constant 0 : i32
    %c0_i32_0 = arith.constant 0 : i32
    %c0_i32_1 = arith.constant 0 : i32
    return %c0_i32, %c0_i32_0 : i32, i32
  }
  func.func @transform_4(%arg0: i32) -> (i32, i32) {
    %c0_i32 = arith.constant 0 : i32
    %c0_i32_0 = arith.constant 0 : i32
    %c0_i32_1 = arith.constant 0 : i32
    return %c0_i32, %c0_i32_0 : i32, i32
  }
  func.func @transform_5(%arg0: i32) -> (i32, i32) {
    %c0_i32 = arith.constant 0 : i32
    %c0_i32_0 = arith.constant 0 : i32
    %c0_i32_1 = arith.constant 0 : i32
    return %c0_i32, %c0_i32_0 : i32, i32
  }
  func.func @transform_6(%arg0: i32) -> (i32, i32) {
    %c0_i32 = arith.constant 0 : i32
    %c0_i32_0 = arith.constant 0 : i32
    %c0_i32_1 = arith.constant 0 : i32
    return %c0_i32, %c0_i32_0 : i32, i32
  }
  func.func @transform_7(%arg0: i32) -> (i32, i32) {
    %c0_i32 = arith.constant 0 : i32
    %c0_i32_0 = arith.constant 0 : i32
    %c0_i32_1 = arith.constant 0 : i32
    return %c0_i32, %c0_i32_0 : i32, i32
  }
  func.func @transform_8(%arg0: i32) -> (i32, i32) {
    %c0_i32 = arith.constant 0 : i32
    %c0_i32_0 = arith.constant 0 : i32
    %c0_i32_1 = arith.constant 0 : i32
    return %c0_i32, %c0_i32_0 : i32, i32
  }
  func.func @transform_9(%arg0: i32) -> (i32, i32) {
    %c0_i32 = arith.constant 0 : i32
    %c0_i32_0 = arith.constant 0 : i32
    return %arg0, %c0_i32 : i32, i32
  }
}

</mosaic_0001>

<llo_original>
// kernel: apply_fn.1
$region0: #{apply_fn.1}
  #allocation0 [shape = 'u32[]', space=smem, size = 0x4, offset = 0x4, fixed_abs, tag = 'smem constant byte address 0x4 - core index']
  #allocation1 [shape = 'u32[144,128]{1,0:T(1,128)}', space=vmem, size = 0x12000, scoped, tag = 'internal scratch']
  #allocation2 [shape = 'f32[1,1]{1,0:T(1,128)S(6)}', space=smem, size = 0x200, scoped, tag = 'scoped memory for apply_fn.1']
  %s0 = inlined_call_operand.vmem [shape: f32[8,12], index: 0, kind: input, shape index: {}]
  %s1 = inlined_call_operand.vmem [shape: f32[8,4], index: 1, kind: input, shape index: {}]
  %s2 = inlined_call_operand.hbm [shape: f32[12,128], index: 2, kind: input, shape index: {}]
  %s3 = inlined_call_operand.vmem [shape: f32[4,128], index: 3, kind: input, shape index: {}]
  %s4 = inlined_call_operand.vmem [shape: f32[1,128], index: 4, kind: input, shape index: {}]
  %s5 = inlined_call_operand.hbm [shape: f32[128,128], index: 5, kind: input, shape index: {}]
  %s6 = inlined_call_operand.vmem [shape: f32[1,128], index: 6, kind: input, shape index: {}]
  %s7 = inlined_call_operand.vmem [shape: f32[1,128], index: 7, kind: input, shape index: {}]
  %s8 = inlined_call_operand.<no memory space> [shape: f32[1,1], index: 8, kind: input, shape index: {}]
  %s9 = inlined_call_operand.vmem [shape: f32[8,1], index: 9, kind: output, shape index: {}]
  %s10 = sld [smem:[#allocation0]]
  $region54: #{apply_fn.1} parent=0
    _
  %s12 = ssub.s32 1, %s10
  %s13 = scalar_select 0, %s12, %s10
  %14 = sst [smem:[#allocation2]] %s8
  $region1: #{apply_fn.1} parent=0
    #allocation3 [shape = 'u8[8192]{0}', space=vmem, size = 0x2000, scoped, tag = 'input window, operand 2, single buffered']
    #allocation4 [shape = 's32[1]{0}', space=sflag, size = 0x4, scoped, tag = 'scoped memory for apply_fn.1']
    #allocation5 [shape = 'u8[65536]{0}', space=vmem, size = 0x10000, scoped, tag = 'input window, operand 5, single buffered']
    #allocation6 [shape = 's32[1]{0}', space=sflag, size = 0x4, scoped, tag = 'scoped memory for apply_fn.1']
    %15 = vsyncpa [#allocation4], 0
    %16 = vsyncpa [#allocation6], 0
    // Predicated region
    $region2: #{apply_fn.1} parent=1 // pred_check
      _
    $region3: #{apply_fn.1} parent=1 // pred_check_branch
      %18 = sbr.rel (0) target = $region5
    $region4: #{apply_fn.1} parent=1 // pred_region
      _
    $region5: #{apply_fn.1} parent=1 // pred_fallthru
      _
    // Predicated region
    $region6: #{apply_fn.1} parent=1 // pred_check
      _
    $region7: #{apply_fn.1} parent=1 // pred_check_branch
      %20 = sbr.rel (0) target = $region9
    $region8: #{apply_fn.1} parent=1 // pred_region
      _
    $region9: #{apply_fn.1} parent=1 // pred_fallthru
      _
    // Predicated region
    $region10: #{apply_fn.1} parent=1 // pred_check
      _
    $region11: #{apply_fn.1} parent=1 // pred_check_branch
      %22 = sbr.rel (0) target = $region13
    $region12: #{apply_fn.1} parent=1 // pred_region
      %s24 = ssub.s32 256, 256
      %25 = vsyncadd [#allocation4], %s24
      %s26 = sshll.u32 [#allocation3], 4
      %s27 = int_to_ptr.vmem [resolvable:$true] %s26
      %32 = dma.hbm_to_vmem [thread:$0]  %s2, 256, %s27, [#allocation4], 128, 128, 8
    $region13: #{apply_fn.1} parent=1 // pred_fallthru
      _
    // Predicated region
    $region14: #{apply_fn.1} parent=1 // pred_check
      _
    $region15: #{apply_fn.1} parent=1 // pred_check_branch
      %34 = sbr.rel (0) target = $region17
    $region16: #{apply_fn.1} parent=1 // pred_region
      _
    $region17: #{apply_fn.1} parent=1 // pred_fallthru
      _
    // Predicated region
    $region18: #{apply_fn.1} parent=1 // pred_check
      _
    $region19: #{apply_fn.1} parent=1 // pred_check_branch
      %36 = sbr.rel (0) target = $region21
    $region20: #{apply_fn.1} parent=1 // pred_region
      _
    $region21: #{apply_fn.1} parent=1 // pred_fallthru
      _
    // Predicated region
    $region22: #{apply_fn.1} parent=1 // pred_check
      _
    $region23: #{apply_fn.1} parent=1 // pred_check_branch
      %38 = sbr.rel (0) target = $region25
    $region24: #{apply_fn.1} parent=1 // pred_region
      %s40 = ssub.s32 2048, 2048
      %41 = vsyncadd [#allocation6], %s40
      %s42 = sshll.u32 [#allocation5], 4
      %s43 = int_to_ptr.vmem [resolvable:$true] %s42
      %48 = dma.hbm_to_vmem [thread:$0]  %s5, 2048, %s43, [#allocation6], 128, 128, 8
    $region25: #{apply_fn.1} parent=1 // pred_fallthru
      _
    // Predicated region
    $region26: #{apply_fn.1} parent=1 // pred_check
      _
    $region27: #{apply_fn.1} parent=1 // pred_check_branch
      %50 = sbr.rel (0) target = $region29
    $region28: #{apply_fn.1} parent=1 // pred_region
      _
    $region29: #{apply_fn.1} parent=1 // pred_fallthru
      _
    // Predicated region
    $region30: #{apply_fn.1} parent=1 // pred_check
      _
    $region31: #{apply_fn.1} parent=1 // pred_check_branch
      %52 = sbr.rel (0) target = $region33
    $region32: #{apply_fn.1} parent=1 // pred_region
      _
    $region33: #{apply_fn.1} parent=1 // pred_fallthru
      _
    // Predicated region
    $region34: #{apply_fn.1} parent=1 // pred_check
      _
    $region35: #{apply_fn.1} parent=1 // pred_check_branch
      %54 = sbr.rel (0) target = $region37
    $region36: #{apply_fn.1} parent=1 // pred_region
      _
    $region37: #{apply_fn.1} parent=1 // pred_fallthru
      _
    // Predicated region
    $region38: #{apply_fn.1} parent=1 // pred_check
      _
    $region39: #{apply_fn.1} parent=1 // pred_check_branch
      %56 = sbr.rel (0) target = $region41
    $region40: #{apply_fn.1} parent=1 // pred_region
      %57 = dma.done [#allocation4], 256
    $region41: #{apply_fn.1} parent=1 // pred_fallthru
      _
    // Predicated region
    $region42: #{apply_fn.1} parent=1 // pred_check
      _
    $region43: #{apply_fn.1} parent=1 // pred_check_branch
      %59 = sbr.rel (0) target = $region45
    $region44: #{apply_fn.1} parent=1 // pred_region
      %60 = dma.done [#allocation6], 2048
    $region45: #{apply_fn.1} parent=1 // pred_fallthru
      _
    %v61 = vld [vmem:[%s0] sm:$0xff]
    %v62 = vld [vmem:[#allocation3] sm:$0xff]
    %v63 = vld [vmem:[#allocation3 + $0x8] sm:$0xf]
    %v64 = vld [vmem:[%s1] sm:$0xff]
    %v65 = vld [vmem:[%s3] sm:$0xf]
    %vm66 = vcmask 31744
    %v68 = vsel %vm66, %v64, 0
    %vm70 = vcmask 1043456
    %v72 = vsel %vm70, %v65, 0
    %74 = vmatprep.subr.mxu0 0.0
    %75 = vmatpush1.msra.mxu0 0.0
    %76 = vmatprep.subr.mxu0 0.0
    %77 = vmatpush1.msra.mxu0 0.0
    %78 = vmatprep.subr.mxu0 0.0
    %79 = vmatpush1.msra.mxu0 0.0
    %80 = vmatprep.subr.mxu0 0.0
    %81 = vmatpush1.msra.mxu0 0.0
    %82 = vmatprep.subr.mxu0 0.0
    %83 = vmatpush1.msra.mxu0 0.0
    %84 = vmatprep.subr.mxu0 0.0
    %85 = vmatpush1.msra.mxu0 0.0
    %86 = vmatprep.subr.mxu0 0.0
    %87 = vmatpush1.msra.mxu0 0.0
    %88 = vmatprep.subr.mxu0 0.0
    %89 = vmatpush1.msra.mxu0 0.0
    %90 = vmatprep.subr.mxu0 0.0
    %91 = vmatpush1.msra.mxu0 0.0
    %92 = vmatprep.subr.mxu0 0.0
    %93 = vmatpush1.msra.mxu0 0.0
    %94 = vmatprep.subr.mxu0 0.0
    %95 = vmatpush1.msra.mxu0 0.0
    %96 = vmatprep.subr.mxu0 0.0
    %97 = vmatpush1.msra.mxu0 0.0
    %98 = vmatprep.subr.mxu0 0.0
    %99 = vmatpush1.msra.mxu0 0.0
    %100 = vmatprep.subr.mxu0 0.0
    %101 = vmatpush1.msra.mxu0 0.0
    %102 = vmatprep.subr.mxu0 0.0
    %103 = vmatpush1.msra.mxu0 0.0
    %104 = vmatprep.subr.mxu0 0.0
    %105 = vmatpush1.msra.mxu0 %v72
    %106 = vmatprep.subr.mxu0 0.0
    %107 = vmatpush2.msra.mxu0 0.0
    %108 = vmatprep.subr.mxu0 0.0
    %109 = vmatpush2.msra.mxu0 0.0
    %110 = vmatprep.subr.mxu0 0.0
    %111 = vmatpush2.msra.mxu0 0.0
    %112 = vmatprep.subr.mxu0 0.0
    %113 = vmatpush2.msra.mxu0 0.0
    %114 = vmatprep.subr.mxu0 0.0
    %115 = vmatpush2.msra.mxu0 0.0
    %116 = vmatprep.subr.mxu0 0.0
    %117 = vmatpush2.msra.mxu0 0.0
    %118 = vmatprep.subr.mxu0 0.0
    %119 = vmatpush2.msra.mxu0 0.0
    %120 = vmatprep.subr.mxu0 0.0
    %121 = vmatpush2.msra.mxu0 0.0
    %122 = vmatprep.subr.mxu0 0.0
    %123 = vmatpush2.msra.mxu0 0.0
    %124 = vmatprep.subr.mxu0 0.0
    %125 = vmatpush2.msra.mxu0 0.0
    %126 = vmatprep.subr.mxu0 0.0
    %127 = vmatpush2.msra.mxu0 0.0
    %128 = vmatprep.subr.mxu0 0.0
    %129 = vmatpush2.msra.mxu0 0.0
    %130 = vmatprep.subr.mxu0 0.0
    %131 = vmatpush2.msra.mxu0 0.0
    %132 = vmatprep.subr.mxu0 0.0
    %133 = vmatpush2.msra.mxu0 0.0
    %134 = vmatprep.subr.mxu0 0.0
    %135 = vmatpush2.msra.mxu0 0.0
    %136 = vmatprep.subr.mxu0 0.0
    %137 = vmatpush2.msra.mxu0 0.0
    %138 = vmatprep.mubr.f32.mxu0 0.0
    %139 = vmatmul.mubr.f32.gmra.mxu0 %v68
    %v140 = vpop.f32.mrf.mxu0
    %v141 = vadd.f32 0.0, %v140
    %v142 = vpop.f32.mrf.mxu0
    %143 = vdwg.mxu0
    %vm144 = vcmask 97280
    %v146 = vsel %vm144, %v61, 0
    %v149 = vsel %vm70, %v63, 0
    %151 = vmatprep.subr.mxu0 0.0
    %152 = vmatpush1.msra.mxu0 0.0
    %153 = vmatprep.subr.mxu0 0.0
    %154 = vmatpush1.msra.mxu0 0.0
    %155 = vmatprep.subr.mxu0 0.0
    %156 = vmatpush1.msra.mxu0 0.0
    %157 = vmatprep.subr.mxu0 0.0
    %158 = vmatpush1.msra.mxu0 0.0
    %159 = vmatprep.subr.mxu0 0.0
    %160 = vmatpush1.msra.mxu0 0.0
    %161 = vmatprep.subr.mxu0 0.0
    %162 = vmatpush1.msra.mxu0 0.0
    %163 = vmatprep.subr.mxu0 0.0
    %164 = vmatpush1.msra.mxu0 0.0
    %165 = vmatprep.subr.mxu0 0.0
    %166 = vmatpush1.msra.mxu0 0.0
    %167 = vmatprep.subr.mxu0 0.0
    %168 = vmatpush1.msra.mxu0 0.0
    %169 = vmatprep.subr.mxu0 0.0
    %170 = vmatpush1.msra.mxu0 0.0
    %171 = vmatprep.subr.mxu0 0.0
    %172 = vmatpush1.msra.mxu0 0.0
    %173 = vmatprep.subr.mxu0 0.0
    %174 = vmatpush1.msra.mxu0 0.0
    %175 = vmatprep.subr.mxu0 0.0
    %176 = vmatpush1.msra.mxu0 0.0
    %177 = vmatprep.subr.mxu0 0.0
    %178 = vmatpush1.msra.mxu0 0.0
    %179 = vmatprep.subr.mxu0 0.0
    %180 = vmatpush1.msra.mxu0 %v149
    %181 = vmatprep.subr.mxu0 0.0
    %182 = vmatpush1.msra.mxu0 %v62
    %183 = vmatprep.subr.mxu0 0.0
    %184 = vmatpush2.msra.mxu0 0.0
    %185 = vmatprep.subr.mxu0 0.0
    %186 = vmatpush2.msra.mxu0 0.0
    %187 = vmatprep.subr.mxu0 0.0
    %188 = vmatpush2.msra.mxu0 0.0
    %189 = vmatprep.subr.mxu0 0.0
    %190 = vmatpush2.msra.mxu0 0.0
    %191 = vmatprep.subr.mxu0 0.0
    %192 = vmatpush2.msra.mxu0 0.0
    %193 = vmatprep.subr.mxu0 0.0
    %194 = vmatpush2.msra.mxu0 0.0
    %195 = vmatprep.subr.mxu0 0.0
    %196 = vmatpush2.msra.mxu0 0.0
    %197 = vmatprep.subr.mxu0 0.0
    %198 = vmatpush2.msra.mxu0 0.0
    %199 = vmatprep.subr.mxu0 0.0
    %200 = vmatpush2.msra.mxu0 0.0
    %201 = vmatprep.subr.mxu0 0.0
    %202 = vmatpush2.msra.mxu0 0.0
    %203 = vmatprep.subr.mxu0 0.0
    %204 = vmatpush2.msra.mxu0 0.0
    %205 = vmatprep.subr.mxu0 0.0
    %206 = vmatpush2.msra.mxu0 0.0
    %207 = vmatprep.subr.mxu0 0.0
    %208 = vmatpush2.msra.mxu0 0.0
    %209 = vmatprep.subr.mxu0 0.0
    %210 = vmatpush2.msra.mxu0 0.0
    %211 = vmatprep.subr.mxu0 0.0
    %212 = vmatpush2.msra.mxu0 0.0
    %213 = vmatprep.subr.mxu0 0.0
    %214 = vmatpush2.msra.mxu0 0.0
    %215 = vmatprep.mubr.f32.mxu0 0.0
    %216 = vmatmul.mubr.f32.gmra.mxu0 %v146
    %v217 = vpop.f32.mrf.mxu0
    %v218 = vadd.f32 %v141, %v217
    %v219 = vpop.f32.mrf.mxu0
    %220 = vdwg.mxu0
    %v221 = vld [vmem:[%s4] sm:$0x1]
    %v223 = vlaneseq
    %v224 = vshrl.u32 %v223, 7
    %v225 = vsub.s32 0, %v224
    %v226 = vrot.slane %v221, %v225
    %v228 = vadd.f32 %v218, %v226
    %v229 = vmax.f32 %v228, 0.0
    %v230 = vld [vmem:[#allocation5] sm:$0xff]
    %v231 = vld [vmem:[#allocation5 + $0x8] sm:$0xff]
    %v232 = vld [vmem:[#allocation5 + $0x10] sm:$0xff]
    %v233 = vld [vmem:[#allocation5 + $0x18] sm:$0xff]
    %v234 = vld [vmem:[#allocation5 + $0x20] sm:$0xff]
    %v235 = vld [vmem:[#allocation5 + $0x28] sm:$0xff]
    %v236 = vld [vmem:[#allocation5 + $0x30] sm:$0xff]
    %v237 = vld [vmem:[#allocation5 + $0x38] sm:$0xff]
    %v238 = vld [vmem:[#allocation5 + $0x40] sm:$0xff]
    %v239 = vld [vmem:[#allocation5 + $0x48] sm:$0xff]
    %v240 = vld [vmem:[#allocation5 + $0x50] sm:$0xff]
    %v241 = vld [vmem:[#allocation5 + $0x58] sm:$0xff]
    %v242 = vld [vmem:[#allocation5 + $0x60] sm:$0xff]
    %v243 = vld [vmem:[#allocation5 + $0x68] sm:$0xff]
    %v244 = vld [vmem:[#allocation5 + $0x70] sm:$0xff]
    %v245 = vld [vmem:[#allocation5 + $0x78] sm:$0xff]
    %v246 = vld [vmem:[%s6] sm:$0x1]
    %v248 = vlaneseq
    %v249 = vshrl.u32 %v248, 7
    %v250 = vsub.s32 0, %v249
    %v251 = vrot.slane %v246, %v250
    %253 = vmatprep.subr.mxu0 0.0
    %254 = vmatpush1.msra.mxu0 %v245
    %255 = vmatprep.subr.mxu0 0.0
    %256 = vmatpush1.msra.mxu0 %v244
    %257 = vmatprep.subr.mxu0 0.0
    %258 = vmatpush1.msra.mxu0 %v243
    %259 = vmatprep.subr.mxu0 0.0
    %260 = vmatpush1.msra.mxu0 %v242
    %261 = vmatprep.subr.mxu0 0.0
    %262 = vmatpush1.msra.mxu0 %v241
    %263 = vmatprep.subr.mxu0 0.0
    %264 = vmatpush1.msra.mxu0 %v240
    %265 = vmatprep.subr.mxu0 0.0
    %266 = vmatpush1.msra.mxu0 %v239
    %267 = vmatprep.subr.mxu0 0.0
    %268 = vmatpush1.msra.mxu0 %v238
    %269 = vmatprep.subr.mxu0 0.0
    %270 = vmatpush1.msra.mxu0 %v237
    %271 = vmatprep.subr.mxu0 0.0
    %272 = vmatpush1.msra.mxu0 %v236
    %273 = vmatprep.subr.mxu0 0.0
    %274 = vmatpush1.msra.mxu0 %v235
    %275 = vmatprep.subr.mxu0 0.0
    %276 = vmatpush1.msra.mxu0 %v234
    %277 = vmatprep.subr.mxu0 0.0
    %278 = vmatpush1.msra.mxu0 %v233
    %279 = vmatprep.subr.mxu0 0.0
    %280 = vmatpush1.msra.mxu0 %v232
    %281 = vmatprep.subr.mxu0 0.0
    %282 = vmatpush1.msra.mxu0 %v231
    %283 = vmatprep.subr.mxu0 0.0
    %284 = vmatpush1.msra.mxu0 %v230
    %285 = vmatprep.subr.mxu0 0.0
    %286 = vmatpush2.msra.mxu0 0.0
    %287 = vmatprep.subr.mxu0 0.0
    %288 = vmatpush2.msra.mxu0 0.0
    %289 = vmatprep.subr.mxu0 0.0
    %290 = vmatpush2.msra.mxu0 0.0
    %291 = vmatprep.subr.mxu0 0.0
    %292 = vmatpush2.msra.mxu0 0.0
    %293 = vmatprep.subr.mxu0 0.0
    %294 = vmatpush2.msra.mxu0 0.0
    %295 = vmatprep.subr.mxu0 0.0
    %296 = vmatpush2.msra.mxu0 0.0
    %297 = vmatprep.subr.mxu0 0.0
    %298 = vmatpush2.msra.mxu0 0.0
    %299 = vmatprep.subr.mxu0 0.0
    %300 = vmatpush2.msra.mxu0 0.0
    %301 = vmatprep.subr.mxu0 0.0
    %302 = vmatpush2.msra.mxu0 0.0
    %303 = vmatprep.subr.mxu0 0.0
    %304 = vmatpush2.msra.mxu0 0.0
    %305 = vmatprep.subr.mxu0 0.0
    %306 = vmatpush2.msra.mxu0 0.0
    %307 = vmatprep.subr.mxu0 0.0
    %308 = vmatpush2.msra.mxu0 0.0
    %309 = vmatprep.subr.mxu0 0.0
    %310 = vmatpush2.msra.mxu0 0.0
    %311 = vmatprep.subr.mxu0 0.0
    %312 = vmatpush2.msra.mxu0 0.0
    %313 = vmatprep.subr.mxu0 0.0
    %314 = vmatpush2.msra.mxu0 0.0
    %315 = vmatprep.subr.mxu0 0.0
    %316 = vmatpush2.msra.mxu0 0.0
    %317 = vmatprep.mubr.f32.mxu0 0.0
    %318 = vmatmul.mubr.f32.gmra.mxu0 %v229
    %v319 = vpop.f32.mrf.mxu0
    %v320 = vadd.f32 %v251, %v319
    %v321 = vpop.f32.mrf.mxu0
    %322 = vdwg.mxu0
    %v323 = vmax.f32 %v320, 0.0
    %v324 = vld [vmem:[%s7] sm:$0x1]
    %v326 = vlaneseq
    %v327 = vshrl.u32 %v326, 7
    %v328 = vsub.s32 0, %v327
    %v329 = vrot.slane %v324, %v328
    %v331 = vmul.f32 %v323, %v329
    %332 = vadd.xlane.f32.xlu0 %v331
    %v333 = vpop.xlane.xlu0 %332
    %s334 = sld [smem:[#allocation2]]
    %v335 = vstv %s334
    %v336 = vadd.f32 %v333, %v335
    %vm337 = vcmask 7168
    %338 = vst.msk [vmem:[%s9] sm:$0xff] %vm337, %v336
    // Predicated region
    $region46: #{apply_fn.1} parent=1 // pred_check
      _
    $region47: #{apply_fn.1} parent=1 // pred_check_branch
      %340 = sbr.rel (0) target = $region49
    $region48: #{apply_fn.1} parent=1 // pred_region
      _
    $region49: #{apply_fn.1} parent=1 // pred_fallthru
      _
    // Predicated region
    $region50: #{apply_fn.1} parent=1 // pred_check
      _
    $region51: #{apply_fn.1} parent=1 // pred_check_branch
      %342 = sbr.rel (0) target = $region53
    $region52: #{apply_fn.1} parent=1 // pred_region
      _
    $region53: #{apply_fn.1} parent=1 // pred_fallthru
      _
    %343 = vsyncpa [#allocation4], 1
    %344 = vsyncpa [#allocation6], 1

</llo_original>
